<compile_context>
chip_gen: v6e
topology: v6e:2x2x1
jax: 0.10.0
libtpu: 0.0.40
codegen_flags: <defaults>
</compile_context>

<pallas_src>
import functools

import jax
import jax.numpy as jnp
from jax.experimental import pallas as pl
from jax.experimental.pallas import tpu as pltpu


def _gmap_kernel(x_ref, w_ref, o_ref, max_acc, attn_acc, *, hw_total, t_hw, need_mask):
    # x_ref: (B_TILE, C, T_HW), w_ref: (1, C), o_ref: (B_TILE, 2, C)
    k = pl.program_id(1)
    n_k = pl.num_programs(1)

    @pl.when(k == 0)
    def _init():
        max_acc[...] = jnp.full_like(max_acc, -jnp.inf)
        attn_acc[...] = jnp.zeros_like(attn_acc)

    # f32 math everywhere: required on v5e (no bf16 VPU/EUP) and safe on v6e/v7x.
    x = x_ref[...].astype(jnp.float32)                       # [Bt, C, T]
    w_col = w_ref[...].astype(jnp.float32).reshape(1, -1, 1)  # [1, C, 1]

    def _accumulate(x_attn, x_max):
        # 1x1 conv (C -> 1, no bias) + sigmoid; sigmoid is pointwise over spatial
        # positions, so per-tile accumulation of the weighted sum is exact.
        logits = jnp.sum(x_attn * w_col, axis=1)              # [Bt, T]   (VPU, not MXU)
        a = jax.nn.sigmoid(logits)                             # [Bt, T]   (EUP)
        max_acc[...] = jnp.maximum(max_acc[...], jnp.max(x_max, axis=2))
        attn_acc[...] += jnp.sum(x_attn * a[:, None, :], axis=2)

    if not need_mask:
        # t_hw divides HW: no masking work on any tile.
        _accumulate(x, x)
    else:
        # Full tiles: completely unmasked path.
        @pl.when(k < n_k - 1)
        def _full_tile():
            _accumulate(x, x)

        # Only the final (partial) tile pays for the mask.  Validity depends only on
        # the lane axis, so build it from a [1, T] iota and broadcast it in the where.
        @pl.when(k == n_k - 1)
        def _tail_tile():
            lane = jax.lax.broadcasted_iota(jnp.int32, (1, t_hw), 1)   # [1, T]
            valid = (k * t_hw + lane) < hw_total                        # [1, T]
            valid3 = valid[:, None, :]                                  # [1, 1, T]
            x_zero = jnp.where(valid3, x, 0.0)       # attn path: padded lanes contribute 0
            x_neg = jnp.where(valid3, x, -jnp.inf)   # max path:  padded lanes never win
            _accumulate(x_zero, x_neg)

    @pl.when(k == n_k - 1)
    def _finalize():
        # Direct row stores (lane-dense along C); avoids a stack/relayout.
        o_ref[:, 0, :] = max_acc[...].astype(o_ref.dtype)
        o_ref[:, 1, :] = attn_acc[...].astype(o_ref.dtype)


def _tpu_vmem_capacity_bytes():
    """Best-effort query of physical VMEM; returns None if unavailable."""
    try:
        info = pltpu.get_tpu_info()
        cap = getattr(info, "vmem_capacity_bytes", None)
        if cap:
            return int(cap)
    except Exception:
        pass
    return None


def _pick_t_hw(hw_total, per_hw_bytes, budget):
    """Pick the HW tile: whole extent if it fits, else the largest multiple of 128
    under budget, preferring one that divides HW (no tail mask, even DMA sizes)."""
    if hw_total * per_hw_bytes <= budget:
        return hw_total
    max_t = max(128, (budget // (per_hw_bytes * 128)) * 128)
    for cand in range(max_t, 0, -128):
        if hw_total % cand == 0:
            return cand
    return max_t


def global_max_attn_pool2d(x, attn_weight, *, b_tile=None, t_hw=None):
    """x: [B, C, H, W]; attn_weight: [1, C, 1, 1] (Conv2d(C, 1, 1, bias=False) weight).

    Returns [B, 2*C, 1, 1] matching torch.cat([GlobalMaxPool2d(x), GlobalAttnPool2d(x)], 1).
    """
    B, C, H, W = x.shape
    HW = H * W
    itemsize = jnp.dtype(x.dtype).itemsize

    # --- generation-aware sizing ---------------------------------------------------
    # v7x-class parts (64 MiB VMEM, ~3.2 TB/s HBM): use a larger block so the ~0.35us
    # per-grid-step overhead amortizes, but keep the scoped-vmem cap conservative.
    # 128 MiB parts (v5e/v6e): 8 MiB blocks are plenty; allow a higher cap.
    # Unknown (query failed): conservative on both.
    vmem_cap_phys = _tpu_vmem_capacity_bytes()
    if vmem_cap_phys is not None and vmem_cap_phys <= (80 << 20):
        budget, vmem_cap = 12 * 1024 * 1024, 48 << 20
    elif vmem_cap_phys is not None:
        budget, vmem_cap = 8 * 1024 * 1024, 96 << 20
    else:
        budget, vmem_cap = 8 * 1024 * 1024, 48 << 20

    # --- batch tile: amortize per-step overhead but keep >= 2 grid steps on the
    # "parallel" batch axis so both v7x TensorCores get work.
    if b_tile is None:
        b_tile = 1
        for cand in (16, 8, 4, 2):
            if (B % cand == 0 and B // cand >= 2
                    and cand * C * min(HW, 128) * itemsize <= budget):
                b_tile = cand
                break
    elif B % b_tile != 0:
        raise ValueError(f"b_tile={b_tile} must divide B={B}")

    # --- spatial tile: multiple of 128, ideally dividing HW (avoids tail masking).
    per_hw_bytes = b_tile * C * itemsize
    if t_hw is None:
        t_hw = _pick_t_hw(HW, per_hw_bytes, budget)
    t_hw = min(t_hw, HW)
    n_hw = pl.cdiv(HW, t_hw)
    need_mask = (HW % t_hw) != 0

    x_flat = x.reshape(B, C, HW)
    w2d = attn_weight.reshape(1, C)

    x_block_bytes = b_tile * C * t_hw * itemsize
    vmem_limit = int(min(max(3 * x_block_bytes + (4 << 20), 32 << 20), vmem_cap))

    kernel = functools.partial(
        _gmap_kernel, hw_total=HW, t_hw=t_hw, need_mask=need_mask
    )

    out = pl.pallas_call(
        kernel,
        out_shape=jax.ShapeDtypeStruct((B, 2, C), x.dtype),
        grid_spec=pltpu.PrefetchScalarGridSpec(
            num_scalar_prefetch=0,
            grid=(B // b_tile, n_hw),
            in_specs=[
                pl.BlockSpec((b_tile, C, t_hw), lambda b, k: (b, 0, k)),
                pl.BlockSpec((1, C), lambda b, k: (0, 0)),
            ],
            out_specs=pl.BlockSpec((b_tile, 2, C), lambda b, k: (b, 0, 0)),
            scratch_shapes=[
                pltpu.VMEM((b_tile, C), jnp.float32),   # running max
                pltpu.VMEM((b_tile, C), jnp.float32),   # running attn sum
            ],
        ),
        compiler_params=pltpu.CompilerParams(
            dimension_semantics=("parallel", "arbitrary"),
            vmem_limit_bytes=vmem_limit,
        ),
    )(x_flat, w2d)

    # [B, 2, C] -> [B, 2*C, 1, 1]  (max block, then attn block)
    return out.reshape(B, 2 * C, 1, 1)


def _reference(x, attn_weight):
    B, C, H, W = x.shape
    mx = jnp.max(x, axis=(2, 3), keepdims=True)                    # [B, C, 1, 1]
    w = attn_weight.reshape(1, C)
    logits = jnp.einsum("oc,bchw->bohw", w, x)                     # [B, 1, H, W]
    a = jax.nn.sigmoid(logits)
    att = jnp.sum(x * a, axis=(2, 3), keepdims=True)               # [B, C, 1, 1]
    return jnp.concatenate([mx, att], axis=1)                      # [B, 2C, 1, 1]


if __name__ == "__main__":
    key = jax.random.PRNGKey(0)
    kx, kw = jax.random.split(key)

    # 1) Small demo shapes (single HW tile path, no masking).
    B, C, H, W = 2, 4, 16, 16
    x = jax.random.normal(kx, (B, C, H, W), dtype=jnp.float32)
    fan_in = C
    bound = 1.0 / jnp.sqrt(fan_in)
    attn_weight = jax.random.uniform(
        kw, (1, C, 1, 1), minval=-bound, maxval=bound, dtype=jnp.float32
    )
    out = jax.block_until_ready(global_max_attn_pool2d(x, attn_weight))
    ref = _reference(x, attn_weight)
    assert out.shape == (B, 2 * C, 1, 1), out.shape
    assert jnp.allclose(out, ref, atol=1e-5, rtol=1e-5), float(jnp.max(jnp.abs(out - ref)))

    # 2) HW-tiled reduction with a masked partial tail (HW=400, t_hw=128 -> 4 tiles).
    B2, C2, H2, W2 = 4, 8, 20, 20
    kx2, kw2 = jax.random.split(jax.random.PRNGKey(1))
    x2 = jax.random.normal(kx2, (B2, C2, H2, W2), dtype=jnp.float32)
    w2 = jax.random.uniform(kw2, (1, C2, 1, 1), minval=-0.5, maxval=0.5, dtype=jnp.float32)
    out2 = jax.block_until_ready(global_max_attn_pool2d(x2, w2, b_tile=2, t_hw=128))
    ref2 = _reference(x2, w2)
    assert jnp.allclose(out2, ref2, atol=1e-5, rtol=1e-5), float(jnp.max(jnp.abs(out2 - ref2)))

    # 3) Multi-tile path where t_hw divides HW exactly (no mask path emitted).
    B3, C3, H3, W3 = 2, 8, 32, 32                  # HW=1024, t_hw=256 -> 4 full tiles
    kx3, kw3 = jax.random.split(jax.random.PRNGKey(2))
    x3 = jax.random.normal(kx3, (B3, C3, H3, W3), dtype=jnp.float32)
    w3 = jax.random.uniform(kw3, (1, C3, 1, 1), minval=-0.5, maxval=0.5, dtype=jnp.float32)
    out3 = jax.block_until_ready(global_max_attn_pool2d(x3, w3, b_tile=1, t_hw=256))
    ref3 = _reference(x3, w3)
    assert jnp.allclose(out3, ref3, atol=1e-5, rtol=1e-5), float(jnp.max(jnp.abs(out3 - ref3)))

    print("KERNEL_OK")
</pallas_src>

<mosaic_0001>
module attributes {stable_mosaic.version = 11 : i64} {
  func.func @_gmap_kernel(%arg0: i32, %arg1: i32, %arg2: memref<1x4x256xf32, #tpu.memory_space<vmem>>, %arg3: memref<1x4xf32, #tpu.memory_space<vmem>>, %arg4: memref<1x2x4xf32, #tpu.memory_space<vmem>>, %arg5: memref<1x4xf32, #tpu.memory_space<vmem>>, %arg6: memref<1x4xf32, #tpu.memory_space<vmem>>) attributes {dimension_semantics = [#tpu.dimension_semantics<parallel>, #tpu.dimension_semantics<arbitrary>], iteration_bounds = array<i64: 2, 1>, scalar_prefetch = 0 : i64, scratch_operands = 2 : i64, tpu.core_type = #tpu.core_type<tc>, window_params = [{transform_indices = @transform_0, window_bounds = array<i64: 1, 4, 256>}, {pipeline_mode = #tpu.pipeline_mode<synchronous>, transform_indices = @transform_1, window_bounds = array<i64: 1, 4>}, {transform_indices = @transform_2, window_bounds = array<i64: 1, 2, 4>}]} {
    %c0_i32 = arith.constant 0 : i32
    %0 = arith.cmpi eq, %arg1, %c0_i32 : i32
    %1 = arith.extui %0 : i1 to i32
    %c0_i32_0 = arith.constant 0 : i32
    %2 = arith.cmpi ne, %1, %c0_i32_0 : i32
    scf.if %2 {
      %cst_18 = arith.constant 0xFF800000 : f32
      %28 = vector.broadcast %cst_18 : f32 to vector<1x4xf32>
      %c0_19 = arith.constant 0 : index
      %c0_20 = arith.constant 0 : index
      %29 = vector.load %arg5[%c0_19, %c0_20] : memref<1x4xf32, #tpu.memory_space<vmem>>, vector<1x4xf32>
      tpu.vector_store %arg5[%c0_19, %c0_20], %28 {strides = array<i32>} : memref<1x4xf32, #tpu.memory_space<vmem>>, vector<1x4xf32>,
      %cst_21 = arith.constant 0.000000e+00 : f32
      %30 = vector.broadcast %cst_21 : f32 to vector<1x4xf32>
      %c0_22 = arith.constant 0 : index
      %c0_23 = arith.constant 0 : index
      %31 = vector.load %arg6[%c0_22, %c0_23] : memref<1x4xf32, #tpu.memory_space<vmem>>, vector<1x4xf32>
      tpu.vector_store %arg6[%c0_22, %c0_23], %30 {strides = array<i32>} : memref<1x4xf32, #tpu.memory_space<vmem>>, vector<1x4xf32>,
    } else {
    }
    %c0 = arith.constant 0 : index
    %c0_1 = arith.constant 0 : index
    %c0_2 = arith.constant 0 : index
    %3 = vector.load %arg2[%c0, %c0_1, %c0_2] : memref<1x4x256xf32, #tpu.memory_space<vmem>>, vector<1x4x256xf32>
    %c0_3 = arith.constant 0 : index
    %c0_4 = arith.constant 0 : index
    %4 = vector.load %arg3[%c0_3, %c0_4] : memref<1x4xf32, #tpu.memory_space<vmem>>, vector<1x4xf32>
    %5 = vector.shape_cast %4 : vector<1x4xf32> to vector<1x4x1xf32>
    %6 = vector.broadcast %5 : vector<1x4x1xf32> to vector<1x4x256xf32>
    %7 = arith.mulf %3, %6 : vector<1x4x256xf32>
    %cst = arith.constant dense<0.000000e+00> : vector<1x256xf32>
    %8 = vector.multi_reduction <add>, %7, %cst [1] : vector<1x4x256xf32> to vector<1x256xf32>
    %9 = arith.negf %8 : vector<1x256xf32>
    %10 = math.exp %9 : vector<1x256xf32>
    %cst_5 = arith.constant 1.000000e+00 : f32
    %11 = vector.broadcast %cst_5 : f32 to vector<1x256xf32>
    %12 = arith.addf %11, %10 : vector<1x256xf32>
    %13 = arith.divf %11, %12 : vector<1x256xf32>
    %c0_6 = arith.constant 0 : index
    %c0_7 = arith.constant 0 : index
    %14 = vector.load %arg5[%c0_6, %c0_7] : memref<1x4xf32, #tpu.memory_space<vmem>>, vector<1x4xf32>
    %cst_8 = arith.constant dense<0xFF800000> : vector<1x4xf32>
    %15 = vector.multi_reduction <maximumf>, %3, %cst_8 [2] : vector<1x4x256xf32> to vector<1x4xf32>
    %16 = arith.maximumf %14, %15 : vector<1x4xf32>
    %c0_9 = arith.constant 0 : index
    %c0_10 = arith.constant 0 : index
    %17 = vector.load %arg5[%c0_9, %c0_10] : memref<1x4xf32, #tpu.memory_space<vmem>>, vector<1x4xf32>
    tpu.vector_store %arg5[%c0_9, %c0_10], %16 {strides = array<i32>} : memref<1x4xf32, #tpu.memory_space<vmem>>, vector<1x4xf32>,
    %c0_11 = arith.constant 0 : index
    %c0_12 = arith.constant 0 : index
    %18 = vector.load %arg6[%c0_11, %c0_12] : memref<1x4xf32, #tpu.memory_space<vmem>>, vector<1x4xf32>
    %19 = vector.shape_cast %13 : vector<1x256xf32> to vector<1x1x256xf32>
    %20 = vector.broadcast %19 : vector<1x1x256xf32> to vector<1x4x256xf32>
    %21 = arith.mulf %3, %20 : vector<1x4x256xf32>
    %cst_13 = arith.constant dense<0.000000e+00> : vector<1x4xf32>
    %22 = vector.multi_reduction <add>, %21, %cst_13 [2] : vector<1x4x256xf32> to vector<1x4xf32>
    %23 = arith.addf %18, %22 : vector<1x4xf32>
    %c0_14 = arith.constant 0 : index
    %c0_15 = arith.constant 0 : index
    %24 = vector.load %arg6[%c0_14, %c0_15] : memref<1x4xf32, #tpu.memory_space<vmem>>, vector<1x4xf32>
    tpu.vector_store %arg6[%c0_14, %c0_15], %23 {strides = array<i32>} : memref<1x4xf32, #tpu.memory_space<vmem>>, vector<1x4xf32>,
    %c0_i32_16 = arith.constant 0 : i32
    %25 = arith.cmpi eq, %arg1, %c0_i32_16 : i32
    %26 = arith.extui %25 : i1 to i32
    %c0_i32_17 = arith.constant 0 : i32
    %27 = arith.cmpi ne, %26, %c0_i32_17 : i32
    scf.if %27 {
      %c0_18 = arith.constant 0 : index
      %c0_19 = arith.constant 0 : index
      %28 = vector.load %arg5[%c0_18, %c0_19] : memref<1x4xf32, #tpu.memory_space<vmem>>, vector<1x4xf32>
      %c0_20 = arith.constant 0 : index
      %c0_21 = arith.constant 0 : index
      %c0_22 = arith.constant 0 : index
      %29 = vector.load %arg4[%c0_20, %c0_21, %c0_22] : memref<1x2x4xf32, #tpu.memory_space<vmem>>, vector<1x1x4xf32>
      %30 = vector.shape_cast %29 : vector<1x1x4xf32> to vector<1x4xf32>
      %31 = vector.shape_cast %28 : vector<1x4xf32> to vector<1x1x4xf32>
      tpu.vector_store %arg4[%c0_20, %c0_21, %c0_22], %31 {strides = array<i32>} : memref<1x2x4xf32, #tpu.memory_space<vmem>>, vector<1x1x4xf32>,
      %c0_23 = arith.constant 0 : index
      %c0_24 = arith.constant 0 : index
      %32 = vector.load %arg6[%c0_23, %c0_24] : memref<1x4xf32, #tpu.memory_space<vmem>>, vector<1x4xf32>
      %c0_25 = arith.constant 0 : index
      %c1 = arith.constant 1 : index
      %c0_26 = arith.constant 0 : index
      %33 = vector.load %arg4[%c0_25, %c1, %c0_26] : memref<1x2x4xf32, #tpu.memory_space<vmem>>, vector<1x1x4xf32>
      %34 = vector.shape_cast %33 : vector<1x1x4xf32> to vector<1x4xf32>
      %35 = vector.shape_cast %32 : vector<1x4xf32> to vector<1x1x4xf32>
      tpu.vector_store %arg4[%c0_25, %c1, %c0_26], %35 {strides = array<i32>} : memref<1x2x4xf32, #tpu.memory_space<vmem>>, vector<1x1x4xf32>,
    } else {
    }
    return
  }
  func.func @transform_0(%arg0: i32, %arg1: i32) -> (i32, i32, i32) {
    %c0_i32 = arith.constant 0 : i32
    %c0_i32_0 = arith.constant 0 : i32
    return %arg0, %c0_i32, %arg1 : i32, i32, i32
  }
  func.func @transform_1(%arg0: i32, %arg1: i32) -> (i32, i32) {
    %c0_i32 = arith.constant 0 : i32
    %c0_i32_0 = arith.constant 0 : i32
    %c0_i32_1 = arith.constant 0 : i32
    return %c0_i32, %c0_i32_0 : i32, i32
  }
  func.func @transform_2(%arg0: i32, %arg1: i32) -> (i32, i32, i32) {
    %c0_i32 = arith.constant 0 : i32
    %c0_i32_0 = arith.constant 0 : i32
    %c0_i32_1 = arith.constant 0 : i32
    return %arg0, %c0_i32, %c0_i32_0 : i32, i32, i32
  }
}

</mosaic_0001>

<llo_original>
// kernel: tpu_custom_call.1
$region0: #{tpu_custom_call.1}
  #allocation0 [shape = 'u32[]', space=smem, size = 0x4, offset = 0x4, fixed_abs, tag = 'smem constant byte address 0x4 - core index']
  #allocation1 [shape = 'u32[144,128]{1,0:T(1,128)}', space=vmem, size = 0x12000, scoped, tag = 'internal scratch']
  #allocation2 [shape = 'f32[1,4]{1,0:T(1,128)}', space=vmem, size = 0x200, scoped, tag = 'scratch operand']
  #allocation3 [shape = 'f32[1,4]{1,0:T(1,128)}', space=vmem, size = 0x200, scoped, tag = 'scratch operand']
  %s0 = inlined_call_operand.hbm [shape: f32[2,4,256], index: 0, kind: input, shape index: {}]
  %s1 = inlined_call_operand.vmem [shape: f32[1,4], index: 1, kind: input, shape index: {}]
  %s2 = inlined_call_operand.hbm [shape: f32[2,2,4], index: 2, kind: output, shape index: {}]
  %s3 = sld [smem:[#allocation0]]
  $region53: #{tpu_custom_call.1} parent=0
    _
  %s5 = ssub.s32 1, %s3
  %s6 = scalar_select 0, %s5, %s3
  $region1: #{tpu_custom_call.1} parent=0
    #allocation4 [shape = 'u8[8192]{0}', space=vmem, size = 0x2000, scoped, tag = 'input window, operand 0']
    #allocation5 [shape = 's32[2]{0}', space=sflag, size = 0x8, scoped, tag = 'scoped memory for tpu_custom_call.1']
    #allocation6 [shape = 's32[2]{0}', space=sflag, size = 0x8, scoped, tag = 'scoped memory for tpu_custom_call.1']
    #allocation7 [shape = 'u8[2048]{0}', space=vmem, size = 0x800, scoped, tag = 'output window, operand 0']
    %7 = vsyncpa [#allocation5], 0
    %s8 = scalar_lea.sflag [#allocation5], 1
    %9 = vsyncpa %s8, 0
    %10 = vsyncpa [#allocation6], 0
    %s11 = scalar_lea.sflag [#allocation6], 1
    %12 = vsyncpa %s11, 0
    loop: start=0, step=1, limit=4
    $region2: #{tpu_custom_call.1} parent=1 // loop_pre_header
      _
    $region3: #{tpu_custom_call.1} parent=1 // loop_header
      %s14 = sphi 0, %s18
      %p15 = scmp.ge.s32.totalorder %s14, 4
      %s21 = sphi 0, %s33
      %s22 = sphi 0, %s29
      %s23 = sphi 0, %s21
      %s24 = sphi 0, %s22
      %s25 = sphi 0, %s23
      %s26 = sphi 0, %s24
      %s38 = sphi 0, %s40
      %s41 = sphi 0, %s38
      %s42 = sphi 0, %s41
      %s58 = sphi 0, %s42
      %s62 = sphi 0, %s62
      %s64 = sphi 0, %s62
      %s65 = sphi 0, %s64
      %s79 = sphi 0, %s65
      %s85 = sphi 0, %s87
      %s88 = sphi 0, %s85
      %s89 = sphi 0, %s88
      %s105 = sphi 0, %s89
    $region4: #{tpu_custom_call.1} parent=1 // loop_header_branch
      %17 = sbr.rel (%p15) target = $region8
    $region5: #{tpu_custom_call.1} parent=1 // loop_body
      %s19 = ssub.s32 %s14, 1
      %s20 = ssub.s32 %s14, 2
      %s27 = sadd.s32 1, %s22
      %p28 = scmp.ge.s32.totalorder %s27, 1
      %s29 = scalar_select %p28, 0, %s27
      %s30 = sadd.s32 1, %s21
      %s31 = scalar_select %p28, %s30, %s21
      %p32 = scmp.ge.s32.totalorder %s31, 2
      %s33 = scalar_select %p32, 0, %s31
      %s34 = ssub.s32 %s21, %s33
      %s35 = ssub.s32 %s22, %s29
      %s36 = sor.u32 %s34, %s35
      %p37 = scmp.eq.s32.totalorder %s36, 0
      %s39 = sadd.s32 %s38, 1
      %s40 = scalar_select %p37, %s38, %s39
      %p43 = pneg %p37
      %p44 = scmp.eq.s32.totalorder %s14, 1
      %p45 = por %p43, %p44
      %p46 = scmp.ne.s32.totalorder %s38, %s41
      %p47 = scmp.eq.s32.totalorder %s14, 0
      %p48 = por %p46, %p47
      %p49 = scmp.ne.s32.totalorder %s38, %s41
      %p50 = scmp.eq.s32.totalorder %s19, 1
      %p51 = por %p49, %p50
      %p52 = scmp.ne.s32.totalorder %s41, %s42
      %p53 = scmp.eq.s32.totalorder %s19, 0
      %p54 = por %p52, %p53
      %p55 = scmp.ne.s32.totalorder %s41, %s42
      %p56 = scmp.eq.s32.totalorder %s20, 1
      %p57 = por %p55, %p56
      %p59 = scmp.ne.s32.totalorder %s42, %s58
      %p60 = scmp.eq.s32.totalorder %s20, 0
      %p61 = por %p59, %p60
      %s63 = sadd.s32 %s62, 1
      %p66 = scmp.eq.s32.totalorder %s14, 1
      %p67 = scmp.ne.s32.totalorder %s62, %s64
      %p68 = scmp.eq.s32.totalorder %s14, 0
      %p69 = por %p67, %p68
      %p70 = scmp.ne.s32.totalorder %s62, %s64
      %p71 = scmp.eq.s32.totalorder %s19, 1
      %p72 = por %p70, %p71
      %p73 = scmp.ne.s32.totalorder %s64, %s65
      %p74 = scmp.eq.s32.totalorder %s19, 0
      %p75 = por %p73, %p74
      %p76 = scmp.ne.s32.totalorder %s64, %s65
      %p77 = scmp.eq.s32.totalorder %s20, 1
      %p78 = por %p76, %p77
      %p80 = scmp.ne.s32.totalorder %s65, %s79
      %p81 = scmp.eq.s32.totalorder %s20, 0
      %p82 = por %p80, %p81
      %s83 = ssub.s32 %s21, %s33
      %p84 = scmp.eq.s32.totalorder %s83, 0
      %s86 = sadd.s32 %s85, 1
      %s87 = scalar_select %p84, %s85, %s86
      %p90 = pneg %p84
      %p91 = scmp.eq.s32.totalorder %s14, 1
      %p92 = por %p90, %p91
      %p93 = scmp.ne.s32.totalorder %s85, %s88
      %p94 = scmp.eq.s32.totalorder %s14, 0
      %p95 = por %p93, %p94
      %p96 = scmp.ne.s32.totalorder %s85, %s88
      %p97 = scmp.eq.s32.totalorder %s19, 1
      %p98 = por %p96, %p97
      %p99 = scmp.ne.s32.totalorder %s88, %s89
      %p100 = scmp.eq.s32.totalorder %s19, 0
      %p101 = por %p99, %p100
      %p102 = scmp.ne.s32.totalorder %s88, %s89
      %p103 = scmp.eq.s32.totalorder %s20, 1
      %p104 = por %p102, %p103
      %p106 = scmp.ne.s32.totalorder %s89, %s105
      %p107 = scmp.eq.s32.totalorder %s20, 0
      %p108 = por %p106, %p107
      %p109 = scmp.le.s32.totalorder 1, %s14
      %p110 = scmp.lt.s32.totalorder %s14, 3
      %p111 = pnand %p109, %p110
      %p112 = pneg %p111
      // Predicated region
      $region9: #{tpu_custom_call.1} parent=5 // pred_check
        _
      $region10: #{tpu_custom_call.1} parent=5 // pred_check_branch
        %114 = sbr.rel (%p111) target = $region12
      $region11: #{tpu_custom_call.1} parent=5 // pred_region
        %s115 = ssub.s32 %s14, 1
        // Predicated region
        $region13: #{tpu_custom_call.1} parent=11 // pred_check
          %p116 = pneg %p75
        $region14: #{tpu_custom_call.1} parent=11 // pred_check_branch
          %118 = sbr.rel (%p116) target = $region16
        $region15: #{tpu_custom_call.1} parent=11 // pred_region
          _
        $region16: #{tpu_custom_call.1} parent=11 // pred_fallthru
          _
      $region12: #{tpu_custom_call.1} parent=5 // pred_fallthru
        _
      %p119 = scmp.lt.s32.totalorder %s14, 2
      // Predicated region
      $region17: #{tpu_custom_call.1} parent=5 // pred_check
        %p120 = pneg %p119
      $region18: #{tpu_custom_call.1} parent=5 // pred_check_branch
        %122 = sbr.rel (%p120) target = $region20
      $region19: #{tpu_custom_call.1} parent=5 // pred_region
        // Predicated region
        $region21: #{tpu_custom_call.1} parent=19 // pred_check
          %p123 = pneg %p48
        $region22: #{tpu_custom_call.1} parent=19 // pred_check_branch
          %125 = sbr.rel (%p123) target = $region24
        $region23: #{tpu_custom_call.1} parent=19 // pred_region
          %s126 = sand.u32 %s38, 1
          %s127 = scalar_lea.sflag [#allocation5], %s126
          %s128 = sand.u32 %s38, 1
          %s129 = smul.addr %s128, 8
          %s130 = scalar_lea.vmem [#allocation4], %s129
          %s131 = smul.u32 2, %s22
          %s133 = ssub.s32 128, 128
          %134 = vsyncadd %s127, %s133
          %s135 = smul.addr %s21, 2
          %s136 = sadd.s32 %s131, %s135
          %s137 = smul.addr %s136, 64
          %s138 = scalar_lea.hbm %s0, %s137
          %s140 = sshll.u32 %s130, 4
          %s141 = int_to_ptr.vmem [resolvable:$true] %s140
          %143 = dma.hbm_to_vmem [thread:$0]  %s138, 128, %s141, %s127
        $region24: #{tpu_custom_call.1} parent=19 // pred_fallthru
          _
      $region20: #{tpu_custom_call.1} parent=5 // pred_fallthru
        _
      %p144 = scmp.le.s32.totalorder 1, %s14
      %p145 = scmp.lt.s32.totalorder %s14, 3
      %p146 = pnand %p144, %p145
      %p147 = pneg %p146
      // Predicated region
      $region25: #{tpu_custom_call.1} parent=5 // pred_check
        _
      $region26: #{tpu_custom_call.1} parent=5 // pred_check_branch
        %149 = sbr.rel (%p146) target = $region28
      $region27: #{tpu_custom_call.1} parent=5 // pred_region
        %s150 = ssub.s32 %s14, 1
        %s151 = sand.u32 %s41, 1
        %s152 = scalar_lea.sflag [#allocation5], %s151
        %s153 = sand.u32 %s41, 1
        %s154 = smul.addr %s153, 8
        %s155 = scalar_lea.vmem [#allocation4], %s154
        // Predicated region
        $region29: #{tpu_custom_call.1} parent=27 // pred_check
          %p156 = pneg %p54
        $region30: #{tpu_custom_call.1} parent=27 // pred_check_branch
          %158 = sbr.rel (%p156) target = $region32
        $region31: #{tpu_custom_call.1} parent=27 // pred_region
          %159 = dma.done %s152, 128
        $region32: #{tpu_custom_call.1} parent=27 // pred_fallthru
          _
        %s160 = sand.u32 %s41, 1
        %s161 = scalar_lea.sflag [#allocation5], %s160
        %s162 = sand.u32 %s41, 1
        %s163 = smul.addr %s162, 8
        %s164 = scalar_lea.vmem [#allocation4], %s163
        %p165 = pneg %p54
        %p166 = pneg %p51
        %p167 = pneg %p75
        %p168 = pneg %p72
        %p169 = pneg %p101
        %p170 = pneg %p98
        %s171 = sand.u32 %s88, 1
        %s172 = scalar_lea.sflag [#allocation6], %s171
        %s173 = sand.u32 %s88, 1
        %s174 = smul.addr %s173, 2
        %s175 = scalar_lea.vmem [#allocation7], %s174
        %s176 = smul.u32 2, %s24
        %p177 = scmp.eq.s32.totalorder %s24, 0
        // Predicated region
        $region33: #{tpu_custom_call.1} parent=27 // pred_check
          %p178 = pneg %p177
        $region34: #{tpu_custom_call.1} parent=27 // pred_check_branch
          %180 = sbr.rel (%p178) target = $region36
        $region35: #{tpu_custom_call.1} parent=27 // pred_region
          %vm181 = vcmask 24576
          %182 = vst.msk [vmem:[#allocation2] sm:$0x1] %vm181, -inf
          %183 = vst.msk [vmem:[#allocation3] sm:$0x1] %vm181, 0.0
        $region36: #{tpu_custom_call.1} parent=27 // pred_fallthru
          _
        %v184 = vld [vmem:[%s155] sm:$0xff]
        %v185 = vld [vmem:[%s1] sm:$0x1]
        %v186 = vlaneseq
        %v187 = vshrl.u32 %v186, 7
        %v188 = vsub.s32 0, %v187
        %v189 = vrot.slane %v185, %v188
        %191 = vbcast.lane.b32.xlu0 %v189, 256
        %v192 = vpop.permute.xlu0 %191
        %v195 = vunpack.c.l.s4 839922192
        %v196 = vunpack.c.0.s8 %v195
        %v197 = vlaneseq
        %v198 = vshrl.u32 %v197, 7
        %v199 = vsub.s32 %v196, %v198
        %v200 = vrot.slane %v192, %v199
        %v202 = vmul.f32 %v184, %v200
        %v204 = vcombine.high %v202, %v202
        %vm206 = vcmask 1043456
        %v207 = vsel %vm206, %v202, 0.0
        %v208 = vrot.slane %v207, 4
        %v209 = vadd.f32 %v207, %v208
        %v210 = vrot.slane %v209, 2
        %v211 = vadd.f32 %v209, %v210
        %v212 = vrot.slane %v211, 1
        %v213 = vadd.f32 %v211, %v212
        %v214 = vsel %vm206, %v204, 0.0
        %v215 = vrot.slane %v214, 4
        %v216 = vadd.f32 %v214, %v215
        %v217 = vrot.slane %v216, 2
        %v218 = vadd.f32 %v216, %v217
        %v219 = vrot.slane %v218, 1
        %v220 = vadd.f32 %v218, %v219
        %v221 = vxor.u32 %v213, 2147483648
        %v222 = vxor.u32 %v220, 2147483648
        %v223 = vmul.f32 %v221, 1.442695
        %v224 = vpow.pop %v223
        %v225 = vmul.f32 %v222, 1.442695
        %v226 = vpow.pop %v225
        %v227 = vadd.f32 %v224, 1.0
        %v228 = vadd.f32 %v226, 1.0
        %v229 = vrcp.pop %v227
        %v230 = vmul.f32 1.0, %v229
        %v231 = vrcp.pop %v228
        %v232 = vmul.f32 1.0, %v231
        %v233 = vld [vmem:[#allocation2] sm:$0x1]
        %v235 = vcombine.high %v184, %v184
        %v237 = vsel %vm206, %v184, -inf
        %v238 = vsel %vm206, %v235, -inf
        %v239 = vmax.f32 %v237, %v238
        %240 = vmax.xlane.f32.xlu0 %v239
        %v241 = vpop.xlane.xlu0 %240
        %v243 = vlaneseq
        %v244 = vshrl.u32 %v243, 7
        %v245 = vsub.s32 0, %v244
        %v246 = vrot.slane %v241, %v245
        %v247 = vlaneseq
        %v248 = vshrl.u32 %v247, 7
        %v249 = vsub.s32 1, %v248
        %v250 = vrot.slane %v241, %v249
        %v251 = vlaneseq
        %v252 = vshrl.u32 %v251, 7
        %v253 = vsub.s32 2, %v252
        %v254 = vrot.slane %v241, %v253
        %v255 = vlaneseq
        %v256 = vshrl.u32 %v255, 7
        %v257 = vsub.s32 3, %v256
        %v258 = vrot.slane %v241, %v257
        %v259 = vcombine.low %v246, %v250
        %v260 = vcombine.low %v254, %v258
        %v262 = vunpack.c.l.s4 1966171168
        %v263 = vunpack.c.0.s8 %v262
        %v264 = vlaneseq
        %v265 = vshrl.u32 %v264, 7
        %v266 = vsub.s32 %v263, %v265
        %v267 = vrot.slane %v259, %v266
        %v269 = vunpack.c.l.s4 1966171168
        %v270 = vunpack.c.0.s8 %v269
        %v271 = vlaneseq
        %v272 = vshrl.u32 %v271, 7
        %v273 = vsub.s32 %v270, %v272
        %v274 = vrot.slane %v260, %v273
        %v275 = vcombine.low %v267, %v274
        %v277 = vunpack.c.l.s4 1966171168
        %v278 = vunpack.c.0.s8 %v277
        %v279 = vlaneseq
        %v280 = vshrl.u32 %v279, 7
        %v281 = vsub.s32 %v278, %v280
        %v282 = vrot.slane %v275, %v281
        %283 = vset.pattern.permute.xlu0 0
        %284 = vperm.xlu0 %283, %v282
        %v285 = vpop.permute.xlu0 %284
        %v286 = vlaneseq
        %v287 = vand.u32 %v286, 127
        %v288 = vlaneseq
        %v289 = vshrl.u32 %v288, 7
        %v290 = vsub.s32 %v287, %v289
        %v291 = vrot.slane %v285, %v290
        %v293 = vunpack.c.l.s4 1966171168
        %v294 = vunpack.c.0.s8 %v293
        %v295 = vlaneseq
        %v296 = vshrl.u32 %v295, 7
        %v297 = vsub.s32 %v294, %v296
        %v298 = vrot.slane %v291, %v297
        %v300 = vunpack.c.l.s4 1966171168
        %v301 = vunpack.c.0.s8 %v300
        %v302 = vlaneseq
        %v303 = vshrl.u32 %v302, 7
        %v304 = vsub.s32 %v301, %v303
        %v305 = vrot.slane %v298, %v304
        %v307 = vmax.f32 %v233, %v305
        %vm308 = vcmask 24576
        %309 = vst.msk [vmem:[#allocation2] sm:$0x1] %vm308, %v307
        %v310 = vld [vmem:[#allocation3] sm:$0x1]
        %v313 = vcombine.low %v230, %v232
        %v315 = vmul.f32 %v184, %v313
        %v317 = vcombine.high %v315, %v315
        %v319 = vsel %vm206, %v315, 0.0
        %v320 = vsel %vm206, %v317, 0.0
        %v321 = vadd.f32 %v319, %v320
        %322 = vadd.xlane.f32.xlu0 %v321
        %v323 = vpop.xlane.xlu0 %322
        %v325 = vlaneseq
        %v326 = vshrl.u32 %v325, 7
        %v327 = vsub.s32 0, %v326
        %v328 = vrot.slane %v323, %v327
        %v329 = vlaneseq
        %v330 = vshrl.u32 %v329, 7
        %v331 = vsub.s32 1, %v330
        %v332 = vrot.slane %v323, %v331
        %v333 = vlaneseq
        %v334 = vshrl.u32 %v333, 7
        %v335 = vsub.s32 2, %v334
        %v336 = vrot.slane %v323, %v335
        %v337 = vlaneseq
        %v338 = vshrl.u32 %v337, 7
        %v339 = vsub.s32 3, %v338
        %v340 = vrot.slane %v323, %v339
        %v341 = vcombine.low %v328, %v332
        %v342 = vcombine.low %v336, %v340
        %v344 = vunpack.c.l.s4 1966171168
        %v345 = vunpack.c.0.s8 %v344
        %v346 = vlaneseq
        %v347 = vshrl.u32 %v346, 7
        %v348 = vsub.s32 %v345, %v347
        %v349 = vrot.slane %v341, %v348
        %v351 = vunpack.c.l.s4 1966171168
        %v352 = vunpack.c.0.s8 %v351
        %v353 = vlaneseq
        %v354 = vshrl.u32 %v353, 7
        %v355 = vsub.s32 %v352, %v354
        %v356 = vrot.slane %v342, %v355
        %v357 = vcombine.low %v349, %v356
        %v359 = vunpack.c.l.s4 1966171168
        %v360 = vunpack.c.0.s8 %v359
        %v361 = vlaneseq
        %v362 = vshrl.u32 %v361, 7
        %v363 = vsub.s32 %v360, %v362
        %v364 = vrot.slane %v357, %v363
        %365 = vset.pattern.permute.xlu0 0
        %366 = vperm.xlu0 %365, %v364
        %v367 = vpop.permute.xlu0 %366
        %v368 = vlaneseq
        %v369 = vshrl.u32 %v368, 7
        %v370 = vsub.s32 %v287, %v369
        %v371 = vrot.slane %v367, %v370
        %v373 = vunpack.c.l.s4 1966171168
        %v374 = vunpack.c.0.s8 %v373
        %v375 = vlaneseq
        %v376 = vshrl.u32 %v375, 7
        %v377 = vsub.s32 %v374, %v376
        %v378 = vrot.slane %v371, %v377
        %v380 = vunpack.c.l.s4 1966171168
        %v381 = vunpack.c.0.s8 %v380
        %v382 = vlaneseq
        %v383 = vshrl.u32 %v382, 7
        %v384 = vsub.s32 %v381, %v383
        %v385 = vrot.slane %v378, %v384
        %v387 = vadd.f32 %v310, %v385
        %388 = vst.msk [vmem:[#allocation3] sm:$0x1] %vm308, %v387
        // Predicated region
        $region37: #{tpu_custom_call.1} parent=27 // pred_check
          %p389 = pneg %p177
        $region38: #{tpu_custom_call.1} parent=27 // pred_check_branch
          %391 = sbr.rel (%p389) target = $region40
        $region39: #{tpu_custom_call.1} parent=27 // pred_region
          %v392 = vld [vmem:[#allocation2] sm:$0x1]
          %393 = vst.msk [vmem:[%s175] sm:$0x1] %vm308, %v392
          %v394 = vld [vmem:[#allocation3] sm:$0x1]
          %395 = vst.msk [vmem:[%s175 + $0x1] sm:$0x1] %vm308, %v394
        $region40: #{tpu_custom_call.1} parent=27 // pred_fallthru
          _
        %s396 = sand.u32 %s88, 1
        %s397 = scalar_lea.sflag [#allocation6], %s396
        %s398 = sand.u32 %s88, 1
        %s399 = smul.addr %s398, 2
        %s400 = scalar_lea.vmem [#allocation7], %s399
        // Predicated region
        $region41: #{tpu_custom_call.1} parent=27 // pred_check
          %p401 = pneg %p98
        $region42: #{tpu_custom_call.1} parent=27 // pred_check_branch
          %403 = sbr.rel (%p401) target = $region44
        $region43: #{tpu_custom_call.1} parent=27 // pred_region
          %s405 = ssub.s32 32, 32
          %406 = vsyncadd %s397, %s405
          %s407 = smul.addr %s23, 32
          %s408 = scalar_lea.hbm %s2, %s407
          %s410 = sshll.u32 %s400, 4
          %s411 = int_to_ptr.vmem [resolvable:$true] %s410
          %413 = dma.vmem_to_hbm [thread:$0]  %s411, 32, %s408, %s397
        $region44: #{tpu_custom_call.1} parent=27 // pred_fallthru
          _
      $region28: #{tpu_custom_call.1} parent=5 // pred_fallthru
        _
      %p414 = scmp.le.s32.totalorder 2, %s14
      // Predicated region
      $region45: #{tpu_custom_call.1} parent=5 // pred_check
        %p415 = pneg %p414
      $region46: #{tpu_custom_call.1} parent=5 // pred_check_branch
        %417 = sbr.rel (%p415) target = $region48
      $region47: #{tpu_custom_call.1} parent=5 // pred_region
        %s418 = ssub.s32 %s14, 2
        // Predicated region
        $region49: #{tpu_custom_call.1} parent=47 // pred_check
          %p419 = pneg %p104
        $region50: #{tpu_custom_call.1} parent=47 // pred_check_branch
          %421 = sbr.rel (%p419) target = $region52
        $region51: #{tpu_custom_call.1} parent=47 // pred_region
          %s422 = sand.u32 %s89, 1
          %s423 = scalar_lea.sflag [#allocation6], %s422
          %s424 = sand.u32 %s89, 1
          %s425 = smul.addr %s424, 2
          %s426 = scalar_lea.vmem [#allocation7], %s425
          %427 = dma.done %s423, 32
        $region52: #{tpu_custom_call.1} parent=47 // pred_fallthru
          _
      $region48: #{tpu_custom_call.1} parent=5 // pred_fallthru
        _
    $region6: #{tpu_custom_call.1} parent=1 // loop_footer
      %s18 = sadd.s32 1, %s14
    $region7: #{tpu_custom_call.1} parent=1 // loop_footer_branch
      %13 = sbr.rel target = $region3
    $region8: #{tpu_custom_call.1} parent=1 // loop_exit
      _
    %428 = vsyncpa [#allocation5], 1
    %s429 = scalar_lea.sflag [#allocation5], 1
    %430 = vsyncpa %s429, 1
    %431 = vsyncpa [#allocation6], 1
    %s432 = scalar_lea.sflag [#allocation6], 1
    %433 = vsyncpa %s432, 1

</llo_original>
